<compile_context>
chip_gen: v7x
topology: tpu7x:2x2x1
jax: 0.10.0
libtpu: 0.0.40
codegen_flags: <defaults>
</compile_context>

<pallas_src>
import functools
import math

import jax
import jax.numpy as jnp
from jax import lax
from jax.experimental import pallas as pl
from jax.experimental.pallas import tpu as pltpu


# --------------------------------------------------------------------------
# helpers
# --------------------------------------------------------------------------
def _pick_tile(dim, candidates):
    """Largest candidate that evenly divides `dim`, else the full dim."""
    for c in candidates:
        if dim % c == 0:
            return c
    return dim


def _vmem_budget_cap():
    """Device-aware VMEM cap: ~75% of per-core physical VMEM (v7x = 64 MiB)."""
    cap = 64 << 20  # conservative default (v7x per-TensorCore VMEM)
    try:
        info = pltpu.get_tpu_info()
        cap = int(getattr(info, "vmem_capacity_bytes", cap))
    except Exception:
        pass
    return max(24 << 20, (cap * 3) // 4)


_VMEM_CAP = _vmem_budget_cap()


def _mosaic_params(dimension_semantics, block_bytes):
    """Tile-derived VMEM budget (2x for double buffering), device-aware clamp."""
    budget = int(2 * block_bytes) + (4 << 20)
    budget = min(max(budget, 24 << 20), _VMEM_CAP)
    return pltpu.CompilerParams(
        dimension_semantics=dimension_semantics,
        vmem_limit_bytes=budget,
    )


# --------------------------------------------------------------------------
# Tiled linear: y = x @ W.T + b   (W stays in PyTorch (Out, In) layout)
# Optional fused exact-erf GELU and fused residual add in the epilogue.
# --------------------------------------------------------------------------
def _linear_kernel(x_ref, w_ref, b_ref, *rest, activation, has_residual):
    if has_residual:
        r_ref, o_ref, acc_ref = rest
    else:
        o_ref, acc_ref = rest
    k = pl.program_id(2)

    @pl.when(k == 0)
    def _():
        acc_ref[...] = jnp.zeros_like(acc_ref)

    # bf16 operands -> single-pass MXU (f32 is multi-pass); accumulate in f32.
    # Contraction on the "In" axis of both tiles == x @ W.T, no transpose.
    acc_ref[...] += lax.dot_general(
        x_ref[...].astype(jnp.bfloat16),
        w_ref[...].astype(jnp.bfloat16),
        dimension_numbers=(((1,), (1,)), ((), ())),
        preferred_element_type=jnp.float32)

    @pl.when(k == pl.num_programs(2) - 1)
    def _():
        y = acc_ref[...] + b_ref[...].astype(jnp.float32)
        if activation == "gelu":
            # exact-erf GELU (matches nn.GELU()) fused into the epilogue:
            # rides VPU/EUP slots that are idle under the MXU-bound matmul.
            y = 0.5 * y * (1.0 + lax.erf(y * jnp.float32(1.0 / math.sqrt(2.0))))
        if has_residual:
            y = y + r_ref[...].astype(jnp.float32)
        o_ref[...] = y.astype(o_ref.dtype)


def pallas_linear(x2d, w, b, *, activation=None, residual=None):
    """x2d: (M, In); w: (Out, In); b: (Out,) -> (M, Out).

    activation="gelu" applies exact-erf GELU to x@W.T+b.
    residual (M, Out) is added after the (optional) activation.
    """
    M, In = x2d.shape
    Out, In2 = w.shape
    assert In == In2
    tm = _pick_tile(M, (512, 256, 128, 64, 32, 16, 8))
    tn = _pick_tile(Out, (512, 256, 128))
    tk = _pick_tile(In, (512, 256, 128))
    grid = (M // tm, Out // tn, In // tk)
    itemsize = x2d.dtype.itemsize
    has_residual = residual is not None

    in_specs = [
        pl.BlockSpec((tm, tk), lambda i, j, k: (i, k)),
        pl.BlockSpec((tn, tk), lambda i, j, k: (j, k)),
        pl.BlockSpec((1, tn), lambda i, j, k: (0, j)),
    ]
    args = [x2d, w, b.reshape(1, Out)]
    if has_residual:
        # block index independent of k -> fetched once per (i, j) output tile.
        in_specs.append(pl.BlockSpec((tm, tn), lambda i, j, k: (i, j)))
        args.append(residual)

    block_bytes = (tm * tk + tn * tk + tn
                   + (tm * tn if has_residual else 0)) * itemsize \
                  + tm * tn * (itemsize + 4)
    cost = pl.CostEstimate(
        flops=2 * M * Out * In,
        transcendentals=(M * Out if activation == "gelu" else 0),
        bytes_accessed=(M * In + Out * In + Out + M * Out) * itemsize)

    return pl.pallas_call(
        functools.partial(_linear_kernel, activation=activation,
                          has_residual=has_residual),
        out_shape=jax.ShapeDtypeStruct((M, Out), x2d.dtype),
        grid=grid,
        in_specs=in_specs,
        out_specs=pl.BlockSpec((tm, tn), lambda i, j, k: (i, j)),
        scratch_shapes=[pltpu.VMEM((tm, tn), jnp.float32)],
        compiler_params=_mosaic_params(
            ("parallel", "parallel", "arbitrary"), block_bytes),
        cost_estimate=cost,
    )(*args)


# --------------------------------------------------------------------------
# LayerNorm kernel (biased variance like torch), optional fused residual:
#   y = LN(x + r) * gamma + beta
# --------------------------------------------------------------------------
def _layernorm_kernel(x_ref, *rest, eps, has_residual):
    if has_residual:
        r_ref, g_ref, b_ref, o_ref = rest
        x = x_ref[...].astype(jnp.float32) + r_ref[...].astype(jnp.float32)
    else:
        g_ref, b_ref, o_ref = rest
        x = x_ref[...].astype(jnp.float32)
    mean = jnp.mean(x, axis=-1, keepdims=True)
    xc = x - mean
    var = jnp.mean(xc * xc, axis=-1, keepdims=True)
    inv = lax.rsqrt(var + jnp.float32(eps))
    y = xc * inv * g_ref[...].astype(jnp.float32) + b_ref[...].astype(jnp.float32)
    o_ref[...] = y.astype(o_ref.dtype)


def pallas_layernorm(x, gamma, beta, eps, residual=None):
    shape = x.shape
    E = shape[-1]
    x2d = x.reshape(-1, E)
    M = x2d.shape[0]
    tm = _pick_tile(M, (512, 256, 128, 64, 32, 16, 8))
    has_residual = residual is not None

    in_specs = [pl.BlockSpec((tm, E), lambda i: (i, 0))]
    args = [x2d]
    if has_residual:
        in_specs.append(pl.BlockSpec((tm, E), lambda i: (i, 0)))
        args.append(residual.reshape(-1, E))
    in_specs += [pl.BlockSpec((1, E), lambda i: (0, 0)),
                 pl.BlockSpec((1, E), lambda i: (0, 0))]
    args += [gamma.reshape(1, E), beta.reshape(1, E)]

    block_bytes = ((3 if has_residual else 2) * tm * E + 2 * E) * x2d.dtype.itemsize
    out = pl.pallas_call(
        functools.partial(_layernorm_kernel, eps=eps, has_residual=has_residual),
        out_shape=jax.ShapeDtypeStruct((M, E), x2d.dtype),
        grid=(M // tm,),
        in_specs=in_specs,
        out_specs=pl.BlockSpec((tm, E), lambda i: (i, 0)),
        compiler_params=_mosaic_params(("parallel",), block_bytes),
    )(*args)
    return out.reshape(shape)


# --------------------------------------------------------------------------
# Flash-style attention: grid (B*H, q-block, kv-block), online softmax in
# VMEM scratch.  Only a (tq, tkv) score tile is ever resident (v7x-safe), the
# head axis is a "parallel" grid axis (both TensorCores busy even at B=1),
# and fully-masked future kv blocks are skipped with pl.when.
# --------------------------------------------------------------------------
def _flash_attn_kernel(q_ref, k_ref, v_ref, o_ref, m_sc, l_sc, acc_sc, *,
                       head_dim, past_len):
    tq = q_ref.shape[1]
    tkv = k_ref.shape[1]
    qi = pl.program_id(1)
    ki = pl.program_id(2)

    @pl.when(ki == 0)
    def _():
        m_sc[...] = jnp.full_like(m_sc, -jnp.inf)
        l_sc[...] = jnp.zeros_like(l_sc)
        acc_sc[...] = jnp.zeros_like(acc_sc)

    # Skip kv blocks that are entirely in the masked future of this q block.
    block_visible = ki * tkv <= qi * tq + (tq - 1) + past_len

    @pl.when(block_visible)
    def _():
        q = q_ref[0].astype(jnp.bfloat16)            # (tq, D)
        k = k_ref[0].astype(jnp.bfloat16)            # (tkv, D)
        # q @ k.T on the MXU without materializing the transpose.
        s = lax.dot_general(q, k, dimension_numbers=(((1,), (1,)), ((), ())),
                            preferred_element_type=jnp.float32)   # (tq, tkv)
        row = lax.broadcasted_iota(jnp.int32, (tq, tkv), 0) + qi * tq + past_len
        col = lax.broadcasted_iota(jnp.int32, (tq, tkv), 1) + ki * tkv
        # masked_fill BEFORE the 1/sqrt(d) scaling, exactly as in the module.
        s = jnp.where(col <= row, s, jnp.float32(-1e20)) * jnp.float32(
            1.0 / math.sqrt(head_dim))
        m_prev = m_sc[...]
        m_new = jnp.maximum(m_prev, jnp.max(s, axis=-1, keepdims=True))
        alpha = jnp.exp(m_prev - m_new)
        p = jnp.exp(s - m_new)
        l_sc[...] = alpha * l_sc[...] + jnp.sum(p, axis=-1, keepdims=True)
        acc_sc[...] = alpha * acc_sc[...] + jnp.dot(
            p.astype(jnp.bfloat16), v_ref[0].astype(jnp.bfloat16),
            preferred_element_type=jnp.float32)
        m_sc[...] = m_new

    @pl.when(ki == pl.num_programs(2) - 1)
    def _():
        # approx reciprocal -> EUP slot (VPU stays free for the rescales).
        o_ref[0] = (acc_sc[...] *
                    pl.reciprocal(l_sc[...], approx=True)).astype(o_ref.dtype)


def pallas_attention(q, k, v, *, heads, head_dim, past_len):
    """q: (B, S, H*D); k/v: (B, K, H*D) -> (B, S, H*D)."""
    B, S, E = q.shape
    K = k.shape[1]
    H, D = heads, head_dim
    itemsize = q.dtype.itemsize

    # One-time relayout to (B*H, S, D): full-depth MXU contractions over D,
    # clean (8,128)-friendly blocks, and a head-level parallel grid axis.
    def to_heads(t, L):
        return t.reshape(B, L, H, D).transpose(0, 2, 1, 3).reshape(B * H, L, D)

    qh, kh, vh = to_heads(q, S), to_heads(k, K), to_heads(v, K)

    tq = _pick_tile(S, (256, 128, 64, 32, 16, 8))
    tkv = _pick_tile(K, (512, 256, 128, 64, 32, 16, 8))
    grid = (B * H, S // tq, K // tkv)

    block_bytes = ((2 * tq * D + 2 * tkv * D) * itemsize   # q,o + k,v blocks
                   + (tq * (D + 2)) * 4                    # m/l/acc scratch
                   + 4 * tq * tkv * 4)                     # score/exp temps
    cost = pl.CostEstimate(
        flops=4 * B * H * S * K * D,
        transcendentals=B * H * S * K,
        bytes_accessed=(2 * q.size + k.size + v.size) * itemsize)

    out = pl.pallas_call(
        functools.partial(_flash_attn_kernel, head_dim=D, past_len=past_len),
        out_shape=jax.ShapeDtypeStruct((B * H, S, D), q.dtype),
        grid=grid,
        in_specs=[
            pl.BlockSpec((1, tq, D), lambda bh, qi, ki: (bh, qi, 0)),
            pl.BlockSpec((1, tkv, D), lambda bh, qi, ki: (bh, ki, 0)),
            pl.BlockSpec((1, tkv, D), lambda bh, qi, ki: (bh, ki, 0)),
        ],
        out_specs=pl.BlockSpec((1, tq, D), lambda bh, qi, ki: (bh, qi, 0)),
        scratch_shapes=[
            pltpu.VMEM((tq, 1), jnp.float32),   # running max m
            pltpu.VMEM((tq, 1), jnp.float32),   # running denom l
            pltpu.VMEM((tq, D), jnp.float32),   # output accumulator
        ],
        compiler_params=_mosaic_params(
            ("parallel", "parallel", "arbitrary"), block_bytes),
        cost_estimate=cost,
    )(qh, kh, vh)
    # TODO(synk): on v6e, bump k/v pipelining with pipeline_mode=pl.Buffered(3).
    return out.reshape(B, H, S, D).transpose(0, 2, 1, 3).reshape(B, S, E)


# --------------------------------------------------------------------------
# Module-level forward passes (JAX glue around the Pallas kernels)
# --------------------------------------------------------------------------
def self_attention_forward(x, past, p, heads):
    """Mirrors SelfAttention.forward; returns (out, present)."""
    B, S, E = x.shape
    D = E // heads
    qkv = pallas_linear(x.reshape(B * S, E), p["w_attn"], p["b_attn"])
    qkv = qkv.reshape(B, S, 3 * E)
    # TODO(synk): emit q/k/v as three outputs of the qkv linear (out_specs
    # tuple split on the j axis) to avoid this split copy.
    q, k, v = jnp.split(qkv, 3, axis=-1)                 # each (B, S, H*D)

    # present = cat(key.unsqueeze(0), value.unsqueeze(0)) -> (2, B, S, H, D)
    present = jnp.stack(
        [k.reshape(B, S, heads, D), v.reshape(B, S, heads, D)], axis=0)

    past_len = 0
    if past is not None:
        # TODO(synk): decode path should write new K/V into a preallocated
        # cache via input_output_aliases instead of re-copying the whole cache.
        pk = past[0].reshape(B, -1, E)
        pv = past[1].reshape(B, -1, E)
        past_len = pk.shape[1]
        k = jnp.concatenate([pk, k], axis=1)
        v = jnp.concatenate([pv, v], axis=1)

    attn = pallas_attention(q, k, v, heads=heads, head_dim=D, past_len=past_len)
    out = pallas_linear(attn.reshape(B * S, E), p["w_proj"], p["b_proj"])
    return out.reshape(B, S, E), present


def gpt_block_forward(x, past, p, heads):
    """Mirrors GPTBlock.forward (dropout = inference-mode identity)."""
    B, S, E = x.shape
    ln1 = pallas_layernorm(x, p["ln1_g"], p["ln1_b"], p["eps"])
    attn, present = self_attention_forward(ln1, past, p, heads)
    # LN2(attn + x): residual add fused into the LayerNorm kernel.
    add = pallas_layernorm(attn, p["ln2_g"], p["ln2_b"], p["eps"], residual=x)
    add2d = add.reshape(B * S, E)
    # FFN1 with exact-erf GELU fused into the matmul epilogue.
    h = pallas_linear(add2d, p["w_ff1"], p["b_ff1"], activation="gelu")
    # FFN2 with the `ff + add` residual fused into the matmul epilogue.
    out = pallas_linear(h, p["w_ff2"], p["b_ff2"], residual=add2d)
    return out.reshape(B, S, E), present


def gpt2_forward(tokens, params, past=None):
    """Mirrors GPT2.forward; returns (x, presents)."""
    S = tokens.shape[1]
    x = jnp.take(params["wte"], tokens, axis=0) + params["wpe"][:, :S, :]
    presents = []
    for i, blk in enumerate(params["blocks"]):
        past_layer = None if past is None else past[i]
        x, present = gpt_block_forward(x, past_layer, blk, params["heads"])
        presents.append(present)
    return x, presents


# --------------------------------------------------------------------------
# Pure-JAX reference (faithful to the PyTorch module, high-precision matmuls)
# --------------------------------------------------------------------------
def _ref_layernorm(x, g, b, eps):
    m = jnp.mean(x, axis=-1, keepdims=True)
    v = jnp.mean((x - m) ** 2, axis=-1, keepdims=True)
    return (x - m) / jnp.sqrt(v + eps) * g + b


def _ref_linear(x, w, b):
    return jnp.einsum("...i,oi->...o", x, w, precision="highest") + b


def _ref_attention(x, past, p, heads):
    B, S, E = x.shape
    D = E // heads
    e = _ref_linear(x, p["w_attn"], p["b_attn"])
    q, k, v = jnp.split(e, 3, axis=-1)
    q = q.reshape(B, S, heads, D)
    k = k.reshape(B, S, heads, D)
    v = v.reshape(B, S, heads, D)
    present = jnp.stack([k, v], axis=0)
    if past is not None:
        k = jnp.concatenate([past[0], k], axis=1)
        v = jnp.concatenate([past[1], v], axis=1)
    K = k.shape[1]
    past_len = K - S
    score = jnp.einsum("bqhd,bkhd->bhqk", q, k, precision="highest")
    mask = jnp.arange(K)[None, :] <= (jnp.arange(S)[:, None] + past_len)
    score = jnp.where(mask[None, None], score, -1e20)
    attn = jax.nn.softmax(score / D ** 0.5, axis=-1)
    out = jnp.einsum("bhqk,bkhd->bqhd", attn, v,
                     precision="highest").reshape(B, S, E)
    return _ref_linear(out, p["w_proj"], p["b_proj"]), present


def _ref_block(x, past, p, heads):
    attn, present = _ref_attention(
        _ref_layernorm(x, p["ln1_g"], p["ln1_b"], p["eps"]), past, p, heads)
    add = _ref_layernorm(attn + x, p["ln2_g"], p["ln2_b"], p["eps"])
    h = jax.nn.gelu(_ref_linear(add, p["w_ff1"], p["b_ff1"]), approximate=False)
    ff = _ref_linear(h, p["w_ff2"], p["b_ff2"])
    return ff + add, present


def _ref_gpt2(tokens, params, past=None):
    S = tokens.shape[1]
    x = jnp.take(params["wte"], tokens, axis=0) + params["wpe"][:, :S, :]
    presents = []
    for i, blk in enumerate(params["blocks"]):
        past_layer = None if past is None else past[i]
        x, present = _ref_block(x, past_layer, blk, params["heads"])
        presents.append(present)
    return x, presents


# --------------------------------------------------------------------------
if __name__ == "__main__":
    vocab, E, heads, n_layers, ffx, max_len = 64, 32, 4, 2, 4, 16
    B, S = 2, 8
    D = E // heads
    eps = 1e-5

    key = jax.random.PRNGKey(0)
    key, tok_key, wte_key, wpe_key = jax.random.split(key, 4)
    tokens = jax.random.randint(tok_key, (B, S), 0, vocab, dtype=jnp.int32)

    def init(k, shape, scale=0.02):
        return jax.random.normal(k, shape, dtype=jnp.float32) * scale

    blocks = []
    for _ in range(n_layers):
        keys = jax.random.split(key, 9)
        key = keys[0]
        blocks.append(dict(
            eps=eps,
            ln1_g=jnp.ones((E,), jnp.float32), ln1_b=jnp.zeros((E,), jnp.float32),
            ln2_g=jnp.ones((E,), jnp.float32), ln2_b=jnp.zeros((E,), jnp.float32),
            w_attn=init(keys[1], (3 * E, E)), b_attn=init(keys[2], (3 * E,)),
            w_proj=init(keys[3], (E, E)), b_proj=init(keys[4], (E,)),
            w_ff1=init(keys[5], (ffx * E, E)), b_ff1=init(keys[6], (ffx * E,)),
            w_ff2=init(keys[7], (E, ffx * E)), b_ff2=init(keys[8], (E,)),
        ))
    params = dict(
        heads=heads,
        wte=init(wte_key, (vocab, E)),
        wpe=init(wpe_key, (1, max_len, E)),
        blocks=blocks,
    )

    past = None  # TODO(synk): decode path with preallocated aliased KV cache.
    out, presents = gpt2_forward(tokens, params, past)
    jax.block_until_ready((out, presents))

    ref_out, ref_presents = _ref_gpt2(tokens, params, past)
    assert out.shape == (B, S, E)
    assert len(presents) == n_layers
    # bf16 MXU operands + approx softmax reciprocal -> compare against the
    # full-f32 reference with bf16-appropriate tolerances.
    for pres, ref_pres in zip(presents, ref_presents):
        assert pres.shape == (2, B, S, heads, D)
        assert jnp.allclose(pres, ref_pres, rtol=2e-2, atol=5e-3)
    assert jnp.allclose(out, ref_out, rtol=2e-2, atol=2e-2)

    print("KERNEL_OK")
</pallas_src>

<mosaic_0001>
module attributes {stable_mosaic.version = 11 : i64} {
  func.func @_layernorm_kernel(%arg0: i32, %arg1: memref<16x32xf32, #tpu.memory_space<vmem>>, %arg2: memref<1x32xf32, #tpu.memory_space<vmem>>, %arg3: memref<1x32xf32, #tpu.memory_space<vmem>>, %arg4: memref<16x32xf32, #tpu.memory_space<vmem>>) attributes {dimension_semantics = [#tpu.dimension_semantics<parallel>], iteration_bounds = array<i64: 1>, scalar_prefetch = 0 : i64, scratch_operands = 0 : i64, tpu.core_type = #tpu.core_type<tc>, window_params = [{transform_indices = @transform_0, window_bounds = array<i64: 16, 32>}, {pipeline_mode = #tpu.pipeline_mode<synchronous>, transform_indices = @transform_1, window_bounds = array<i64: 1, 32>}, {pipeline_mode = #tpu.pipeline_mode<synchronous>, transform_indices = @transform_2, window_bounds = array<i64: 1, 32>}, {transform_indices = @transform_3, window_bounds = array<i64: 16, 32>}]} {
    %c0 = arith.constant 0 : index
    %c0_0 = arith.constant 0 : index
    %0 = vector.load %arg1[%c0, %c0_0] : memref<16x32xf32, #tpu.memory_space<vmem>>, vector<16x32xf32>
    %cst = arith.constant dense<0.000000e+00> : vector<16xf32>
    %1 = vector.multi_reduction <add>, %0, %cst [1] : vector<16x32xf32> to vector<16xf32>
    %2 = vector.shape_cast %1 : vector<16xf32> to vector<16x1xf32>
    %cst_1 = arith.constant 3.200000e+01 : f32
    %3 = vector.broadcast %cst_1 : f32 to vector<16x1xf32>
    %4 = arith.divf %2, %3 : vector<16x1xf32>
    %5 = vector.broadcast %4 : vector<16x1xf32> to vector<16x32xf32>
    %6 = arith.subf %0, %5 : vector<16x32xf32>
    %7 = arith.mulf %6, %6 : vector<16x32xf32>
    %cst_2 = arith.constant dense<0.000000e+00> : vector<16xf32>
    %8 = vector.multi_reduction <add>, %7, %cst_2 [1] : vector<16x32xf32> to vector<16xf32>
    %9 = vector.shape_cast %8 : vector<16xf32> to vector<16x1xf32>
    %cst_3 = arith.constant 3.200000e+01 : f32
    %10 = vector.broadcast %cst_3 : f32 to vector<16x1xf32>
    %11 = arith.divf %9, %10 : vector<16x1xf32>
    %cst_4 = arith.constant 9.99999974E-6 : f32
    %12 = vector.broadcast %cst_4 : f32 to vector<16x1xf32>
    %13 = arith.addf %11, %12 : vector<16x1xf32>
    %14 = math.rsqrt %13 : vector<16x1xf32>
    %15 = vector.broadcast %14 : vector<16x1xf32> to vector<16x32xf32>
    %16 = arith.mulf %6, %15 : vector<16x32xf32>
    %c0_5 = arith.constant 0 : index
    %c0_6 = arith.constant 0 : index
    %17 = vector.load %arg2[%c0_5, %c0_6] : memref<1x32xf32, #tpu.memory_space<vmem>>, vector<1x32xf32>
    %18 = vector.broadcast %17 : vector<1x32xf32> to vector<16x32xf32>
    %19 = arith.mulf %16, %18 : vector<16x32xf32>
    %c0_7 = arith.constant 0 : index
    %c0_8 = arith.constant 0 : index
    %20 = vector.load %arg3[%c0_7, %c0_8] : memref<1x32xf32, #tpu.memory_space<vmem>>, vector<1x32xf32>
    %21 = vector.broadcast %20 : vector<1x32xf32> to vector<16x32xf32>
    %22 = arith.addf %19, %21 : vector<16x32xf32>
    %c0_9 = arith.constant 0 : index
    %c0_10 = arith.constant 0 : index
    %23 = vector.load %arg4[%c0_9, %c0_10] : memref<16x32xf32, #tpu.memory_space<vmem>>, vector<16x32xf32>
    tpu.vector_store %arg4[%c0_9, %c0_10], %22 {strides = array<i32>} : memref<16x32xf32, #tpu.memory_space<vmem>>, vector<16x32xf32>,
    return
  }
  func.func @transform_0(%arg0: i32) -> (i32, i32) {
    %c0_i32 = arith.constant 0 : i32
    %c0_i32_0 = arith.constant 0 : i32
    return %arg0, %c0_i32 : i32, i32
  }
  func.func @transform_1(%arg0: i32) -> (i32, i32) {
    %c0_i32 = arith.constant 0 : i32
    %c0_i32_0 = arith.constant 0 : i32
    %c0_i32_1 = arith.constant 0 : i32
    return %c0_i32, %c0_i32_0 : i32, i32
  }
  func.func @transform_2(%arg0: i32) -> (i32, i32) {
    %c0_i32 = arith.constant 0 : i32
    %c0_i32_0 = arith.constant 0 : i32
    %c0_i32_1 = arith.constant 0 : i32
    return %c0_i32, %c0_i32_0 : i32, i32
  }
  func.func @transform_3(%arg0: i32) -> (i32, i32) {
    %c0_i32 = arith.constant 0 : i32
    %c0_i32_0 = arith.constant 0 : i32
    return %arg0, %c0_i32 : i32, i32
  }
}

</mosaic_0001>

<llo_original>
// kernel: tpu_custom_call.1
$region0: #{tpu_custom_call.1}
  #allocation0 [shape = 'u32[]', space=smem, size = 0x4, offset = 0x4, fixed_abs, tag = 'smem constant byte address 0x4 - core index']
  #allocation1 [shape = 'u32[144,128]{1,0:T(1,128)}', space=vmem, size = 0x12000, scoped, tag = 'internal scratch']
  %s0 = inlined_call_operand.hbm [shape: f32[16,32], index: 0, kind: input, shape index: {}]
  %s1 = inlined_call_operand.vmem [shape: f32[1,32], index: 1, kind: input, shape index: {}]
  %s2 = inlined_call_operand.vmem [shape: f32[1,32], index: 2, kind: input, shape index: {}]
  %s3 = inlined_call_operand.hbm [shape: f32[16,32], index: 3, kind: output, shape index: {}]
  %s4 = sld [smem:[#allocation0]]
  $region26: #{tpu_custom_call.1} parent=0
    _
  %s6 = ssub.s32 1, %s4
  %s7 = scalar_select 0, %s6, %s4
  $region1: #{tpu_custom_call.1} parent=0
    #allocation2 [shape = 'u8[8192]{0}', space=vmem, size = 0x2000, scoped, tag = 'input window, operand 0, single buffered']
    #allocation3 [shape = 's32[1]{0}', space=sflag, size = 0x4, scoped, tag = 'scoped memory for tpu_custom_call.1']
    #allocation4 [shape = 's32[1]{0}', space=sflag, size = 0x4, scoped, tag = 'scoped memory for tpu_custom_call.1']
    #allocation5 [shape = 'u8[8192]{0}', space=vmem, size = 0x2000, scoped, tag = 'output window, operand 0, single buffered']
    %8 = vsyncpa [#allocation3], 0
    %9 = vsyncpa [#allocation4], 0
    // Predicated region
    $region2: #{tpu_custom_call.1} parent=1 // pred_check
      _
    $region3: #{tpu_custom_call.1} parent=1 // pred_check_branch
      %11 = sbr.rel (0) target = $region5
    $region4: #{tpu_custom_call.1} parent=1 // pred_region
      %s13 = ssub.s32 256, 256
      %14 = vsyncadd [#allocation3], %s13
      %s15 = sshll.u32 [#allocation2], 4
      %s16 = int_to_ptr.vmem [resolvable:$true] %s15
      %21 = dma.hbm_to_vmem [thread:$0]  %s0, 256, %s16, [#allocation3], 128, 128, 8
    $region5: #{tpu_custom_call.1} parent=1 // pred_fallthru
      _
    // Predicated region
    $region6: #{tpu_custom_call.1} parent=1 // pred_check
      _
    $region7: #{tpu_custom_call.1} parent=1 // pred_check_branch
      %23 = sbr.rel (0) target = $region9
    $region8: #{tpu_custom_call.1} parent=1 // pred_region
      _
    $region9: #{tpu_custom_call.1} parent=1 // pred_fallthru
      _
    // Predicated region
    $region10: #{tpu_custom_call.1} parent=1 // pred_check
      _
    $region11: #{tpu_custom_call.1} parent=1 // pred_check_branch
      %25 = sbr.rel (0) target = $region13
    $region12: #{tpu_custom_call.1} parent=1 // pred_region
      _
    $region13: #{tpu_custom_call.1} parent=1 // pred_fallthru
      _
    // Predicated region
    $region14: #{tpu_custom_call.1} parent=1 // pred_check
      _
    $region15: #{tpu_custom_call.1} parent=1 // pred_check_branch
      %27 = sbr.rel (0) target = $region17
    $region16: #{tpu_custom_call.1} parent=1 // pred_region
      %28 = dma.done [#allocation3], 256
    $region17: #{tpu_custom_call.1} parent=1 // pred_fallthru
      _
    %v29 = vld [vmem:[#allocation2] sm:$0xff]
    %v30 = vld [vmem:[#allocation2 + $0x8] sm:$0xff]
    %vm31 = vcmask 261120
    %v32 = vsel %vm31, %v29, 0.0
    %33 = vadd.xlane.f32.xlu0 %v32
    %v34 = vpop.xlane.xlu0 %33
    %v35 = vsel %vm31, %v30, 0.0
    %36 = vadd.xlane.f32.xlu0 %v35
    %v37 = vpop.xlane.xlu0 %36
    %v38 = vrcp.pop 32.0
    %v39 = vmul.f32 %v34, %v38
    %v40 = vmul.f32 %v37, %v38
    %v41 = vsub.f32 %v29, %v39
    %v42 = vsub.f32 %v30, %v40
    %v43 = vmul.f32 %v41, %v41
    %v44 = vmul.f32 %v42, %v42
    %v45 = vsel %vm31, %v43, 0.0
    %46 = vadd.xlane.f32.xlu0 %v45
    %v47 = vpop.xlane.xlu0 %46
    %v48 = vsel %vm31, %v44, 0.0
    %49 = vadd.xlane.f32.xlu0 %v48
    %v50 = vpop.xlane.xlu0 %49
    %v51 = vmul.f32 %v47, %v38
    %v52 = vmul.f32 %v50, %v38
    %v53 = vadd.f32 %v51, 1e-05
    %v54 = vadd.f32 %v52, 1e-05
    %v55 = vrsqrt.pop %v53
    %v56 = vrsqrt.pop %v54
    %v57 = vmul.f32 %v41, %v55
    %v58 = vmul.f32 %v42, %v56
    %v59 = vld [vmem:[%s1] sm:$0x1]
    %v61 = vlaneseq
    %v62 = vshrl.u32 %v61, 7
    %v63 = vsub.s32 0, %v62
    %v64 = vrot.slane %v59, %v63
    %v66 = vmul.f32 %v57, %v64
    %v67 = vmul.f32 %v58, %v64
    %v68 = vld [vmem:[%s2] sm:$0x1]
    %v70 = vlaneseq
    %v71 = vshrl.u32 %v70, 7
    %v72 = vsub.s32 0, %v71
    %v73 = vrot.slane %v68, %v72
    %v75 = vadd.f32 %v66, %v73
    %v76 = vadd.f32 %v67, %v73
    %77 = vst.msk [vmem:[#allocation5] sm:$0xff] %vm31, %v75
    %78 = vst.msk [vmem:[#allocation5 + $0x8] sm:$0xff] %vm31, %v76
    // Predicated region
    $region18: #{tpu_custom_call.1} parent=1 // pred_check
      _
    $region19: #{tpu_custom_call.1} parent=1 // pred_check_branch
      %80 = sbr.rel (0) target = $region21
    $region20: #{tpu_custom_call.1} parent=1 // pred_region
      %s82 = ssub.s32 256, 256
      %83 = vsyncadd [#allocation4], %s82
      %s84 = sshll.u32 [#allocation5], 4
      %s85 = int_to_ptr.vmem [resolvable:$true] %s84
      %90 = dma.vmem_to_hbm [thread:$0]  %s85, 256, %s3, [#allocation4], 128, 128, 8
    $region21: #{tpu_custom_call.1} parent=1 // pred_fallthru
      _
    // Predicated region
    $region22: #{tpu_custom_call.1} parent=1 // pred_check
      _
    $region23: #{tpu_custom_call.1} parent=1 // pred_check_branch
      %92 = sbr.rel (0) target = $region25
    $region24: #{tpu_custom_call.1} parent=1 // pred_region
      %93 = dma.done [#allocation4], 256
    $region25: #{tpu_custom_call.1} parent=1 // pred_fallthru
      _
    %94 = vsyncpa [#allocation3], 1
    %95 = vsyncpa [#allocation4], 1

</llo_original>
